<compile_context>
chip_gen: v7x
topology: tpu7x:2x2x1
jax: 0.10.0
libtpu: 0.0.40
codegen_flags: <defaults>
</compile_context>

<pallas_src>
import functools

import jax
import jax.numpy as jnp
from jax.experimental import pallas as pl
from jax.experimental.pallas import tpu as pltpu


def _grouped_conv_kernel(x_ref, w_ref, b_ref, o_ref, patch_ref, *,
                         KH, KW, Wpp, Lb, N, Cin_g):
    """One group tile, all batch elements fused into the lane axis.

    x_ref    : (N, 1, Cin_g, S)          flattened padded images for this group
    w_ref    : (1, Cout_g, K)            im2col weight slab, K ordered (kh, kw, c)
    b_ref    : (1, Cout_g, 1)
    o_ref    : (1, Cout_g, N*Lb)         lane-dense output, Lb = Ho*Wpp
    patch_ref: (K, N*Lb)                 VMEM scratch: im2col patch matrix
    """
    # Build the im2col patch.  Each (n, tap) is ONE contiguous lane-axis slice
    # of the flattened padded image, stored at a static (sublane, lane) offset.
    # The destination lane offset n*Lb is 128-aligned when Lb % 128 == 0.
    for n in range(N):                         # static unroll; N is small
        base = n * Lb
        for kh in range(KH):
            for kw in range(KW):
                start = kh * Wpp + kw
                row = (kh * KW + kw) * Cin_g
                patch_ref[row:row + Cin_g, base:base + Lb] = (
                    x_ref[n, 0, :, start:start + Lb])

    w = w_ref[0]                               # (Cout_g, K), native dtype (MXU)
    b = b_ref[0].astype(jnp.float32)           # (Cout_g, 1), bias add stays in f32

    # Single MXU matmul per group: (Cout_g, K) @ (K, N*Lb), f32 accumulation.
    acc = jnp.dot(w, patch_ref[...], preferred_element_type=jnp.float32)
    acc = acc + b                              # broadcast along lanes
    o_ref[0] = acc.astype(o_ref.dtype)         # one lane-dense, unmasked store


def packed_conv2d(x, weight, bias, *, groups, stride=1, padding=1):
    """Grouped Conv2d forward (PyTorch nn.Conv2d semantics), NCHW in / NCHW out."""
    N, Cin, H, W = x.shape
    Cout, Cin_g, KH, KW = weight.shape
    assert Cin % groups == 0 and Cout % groups == 0
    assert Cin // groups == Cin_g
    Cout_g = Cout // groups
    assert stride == 1  # TODO(synk): general stride via strided in-kernel lane slices

    Hp, Wp = H + 2 * padding, W + 2 * padding
    Ho = Hp - KH + 1
    Wo = Wp - KW + 1

    # Widen the padded width to Wpp so each batch's flattened output row length
    # Lb = Ho*Wpp is a multiple of 128 (lane-aligned patch writes / stores),
    # unless that would blow up the padded image too much.
    Wpp = Wp
    for cand in range(Wp, Wp + 128):
        if (Ho * cand) % 128 == 0:
            if cand - Wp <= 32:
                Wpp = cand
            break
    Lb = Ho * Wpp                  # flattened per-batch output length (incl. junk cols)
    K = KH * KW * Cin_g
    # One extra zero row at the bottom keeps every tap's length-Lb flat slice in
    # bounds: (KH-1)*Wpp + (KW-1) + Lb <= (Hp+1)*Wpp for stride 1.
    S = (Hp + 1) * Wpp

    # --- glue (cheap): spatial pad + pure reshapes, no activation transpose ---
    xp = jnp.pad(x, ((0, 0), (0, 0),
                     (padding, padding + 1),
                     (padding, Wpp - W - padding)))
    xf = xp.reshape(N, groups, Cin_g, S)

    # Weight -> (G, Cout_g, K) with K ordered (kh, kw, c) to match the patch rows.
    wg = (weight.reshape(groups, Cout_g, Cin_g, KH, KW)
                .transpose(0, 1, 3, 4, 2)
                .reshape(groups, Cout_g, K))
    bg = bias.reshape(groups, Cout_g, 1)

    kernel = functools.partial(_grouped_conv_kernel, KH=KH, KW=KW, Wpp=Wpp,
                               Lb=Lb, N=N, Cin_g=Cin_g)

    out = pl.pallas_call(
        kernel,
        out_shape=jax.ShapeDtypeStruct((groups, Cout_g, N * Lb), x.dtype),
        grid_spec=pltpu.PrefetchScalarGridSpec(
            num_scalar_prefetch=0,
            grid=(groups,),
            in_specs=[
                pl.BlockSpec((N, 1, Cin_g, S), lambda g: (0, g, 0, 0)),
                pl.BlockSpec((1, Cout_g, K), lambda g: (g, 0, 0)),
                pl.BlockSpec((1, Cout_g, 1), lambda g: (g, 0, 0)),
            ],
            out_specs=pl.BlockSpec((1, Cout_g, N * Lb), lambda g: (g, 0, 0)),
            scratch_shapes=[pltpu.VMEM((K, N * Lb), x.dtype)],
        ),
        compiler_params=pltpu.CompilerParams(
            dimension_semantics=("parallel",)),   # 2-way: both v7x TensorCores busy
    )(xf, wg, bg)

    # --- glue (tiny): strip junk columns, fold (group, batch) back to NCHW ---
    out = out.reshape(groups, Cout_g, N, Ho, Wpp)[..., :Wo]
    out = out.transpose(2, 0, 1, 3, 4).reshape(N, Cout, Ho, Wo)
    return out


def packed_conv2d_params(in_channels, out_channels, kernel_size, alpha, gamma,
                         n_estimators, first=False, last=False):
    """Mirror of PackedConv2d.__init__ shape logic."""
    real_in = in_channels * alpha
    real_out = out_channels * alpha
    if first:
        real_in = in_channels
    if last:
        real_out = out_channels * n_estimators
    groups = gamma * n_estimators
    if first:
        groups = 1
    if real_in % groups or real_out % groups:
        raise ValueError('Input / output features must be divisible by groups')
    w_shape = (real_out, real_in // groups, kernel_size, kernel_size)
    b_shape = (real_out,)
    return real_in, real_out, groups, w_shape, b_shape


if __name__ == "__main__":
    # PackedConv2d(4, 4, 3, alpha=2, gamma=1, n_estimators=2, stride=1, padding=1)
    in_channels, out_channels, kernel_size = 4, 4, 3
    alpha, gamma, n_estimators = 2, 1, 2
    N, H, W = 2, 16, 16

    real_in, real_out, groups, w_shape, b_shape = packed_conv2d_params(
        in_channels, out_channels, kernel_size, alpha, gamma, n_estimators)

    key = jax.random.PRNGKey(0)
    kx, kw, kb = jax.random.split(key, 3)
    x = jax.random.normal(kx, (N, real_in, H, W), jnp.float32)
    fan_in = w_shape[1] * kernel_size * kernel_size
    weight = jax.random.normal(kw, w_shape, jnp.float32) * (1.0 / fan_in) ** 0.5
    bias = jax.random.normal(kb, b_shape, jnp.float32) * 0.1

    y = packed_conv2d(x, weight, bias, groups=groups, stride=1, padding=1)
    y = jax.block_until_ready(y)

    # Pure-JAX reference (same semantics as torch.nn.Conv2d with groups).
    y_ref = jax.lax.conv_general_dilated(
        x, weight, window_strides=(1, 1), padding=((1, 1), (1, 1)),
        dimension_numbers=("NCHW", "OIHW", "NCHW"),
        feature_group_count=groups) + bias[None, :, None, None]

    assert y.shape == (N, real_out, H, W), y.shape
    assert jnp.allclose(y, y_ref, atol=1e-4, rtol=1e-4), float(
        jnp.max(jnp.abs(y - y_ref)))
    print("KERNEL_OK")
</pallas_src>

<mosaic_0001>
module attributes {stable_mosaic.version = 11 : i64} {
  func.func @_grouped_conv_kernel(%arg0: i32, %arg1: memref<2x1x4x456xf32, #tpu.memory_space<vmem>>, %arg2: memref<1x4x36xf32, #tpu.memory_space<vmem>>, %arg3: memref<1x4x1xf32, #tpu.memory_space<vmem>>, %arg4: memref<1x4x768xf32, #tpu.memory_space<vmem>>, %arg5: memref<36x768xf32, #tpu.memory_space<vmem>>) attributes {dimension_semantics = [#tpu.dimension_semantics<parallel>], iteration_bounds = array<i64: 2>, scalar_prefetch = 0 : i64, scratch_operands = 1 : i64, tpu.core_type = #tpu.core_type<tc>, window_params = [{transform_indices = @transform_0, window_bounds = array<i64: 2, 1, 4, 456>}, {transform_indices = @transform_1, window_bounds = array<i64: 1, 4, 36>}, {transform_indices = @transform_2, window_bounds = array<i64: 1, 4, 1>}, {transform_indices = @transform_3, window_bounds = array<i64: 1, 4, 768>}]} {
    %c0 = arith.constant 0 : index
    %c0_0 = arith.constant 0 : index
    %c0_1 = arith.constant 0 : index
    %c0_2 = arith.constant 0 : index
    %0 = vector.load %arg1[%c0, %c0_0, %c0_1, %c0_2] : memref<2x1x4x456xf32, #tpu.memory_space<vmem>>, vector<1x1x4x384xf32>
    %1 = vector.shape_cast %0 : vector<1x1x4x384xf32> to vector<4x384xf32>
    %c0_3 = arith.constant 0 : index
    %c0_4 = arith.constant 0 : index
    %2 = vector.load %arg5[%c0_3, %c0_4] : memref<36x768xf32, #tpu.memory_space<vmem>>, vector<4x384xf32>
    tpu.vector_store %arg5[%c0_3, %c0_4], %1 {strides = array<i32>} : memref<36x768xf32, #tpu.memory_space<vmem>>, vector<4x384xf32>,
    %c0_5 = arith.constant 0 : index
    %c0_6 = arith.constant 0 : index
    %c0_7 = arith.constant 0 : index
    %c1 = arith.constant 1 : index
    %3 = vector.load %arg1[%c0_5, %c0_6, %c0_7, %c1] : memref<2x1x4x456xf32, #tpu.memory_space<vmem>>, vector<1x1x4x384xf32>
    %4 = vector.shape_cast %3 : vector<1x1x4x384xf32> to vector<4x384xf32>
    %c4 = arith.constant 4 : index
    %c0_8 = arith.constant 0 : index
    %5 = vector.load %arg5[%c4, %c0_8] : memref<36x768xf32, #tpu.memory_space<vmem>>, vector<4x384xf32>
    tpu.vector_store %arg5[%c4, %c0_8], %4 {strides = array<i32>} : memref<36x768xf32, #tpu.memory_space<vmem>>, vector<4x384xf32>,
    %c0_9 = arith.constant 0 : index
    %c0_10 = arith.constant 0 : index
    %c0_11 = arith.constant 0 : index
    %c2 = arith.constant 2 : index
    %6 = vector.load %arg1[%c0_9, %c0_10, %c0_11, %c2] : memref<2x1x4x456xf32, #tpu.memory_space<vmem>>, vector<1x1x4x384xf32>
    %7 = vector.shape_cast %6 : vector<1x1x4x384xf32> to vector<4x384xf32>
    %c8 = arith.constant 8 : index
    %c0_12 = arith.constant 0 : index
    %8 = vector.load %arg5[%c8, %c0_12] : memref<36x768xf32, #tpu.memory_space<vmem>>, vector<4x384xf32>
    tpu.vector_store %arg5[%c8, %c0_12], %7 {strides = array<i32>} : memref<36x768xf32, #tpu.memory_space<vmem>>, vector<4x384xf32>,
    %c0_13 = arith.constant 0 : index
    %c0_14 = arith.constant 0 : index
    %c0_15 = arith.constant 0 : index
    %c24 = arith.constant 24 : index
    %9 = vector.load %arg1[%c0_13, %c0_14, %c0_15, %c24] : memref<2x1x4x456xf32, #tpu.memory_space<vmem>>, vector<1x1x4x384xf32>
    %10 = vector.shape_cast %9 : vector<1x1x4x384xf32> to vector<4x384xf32>
    %c12 = arith.constant 12 : index
    %c0_16 = arith.constant 0 : index
    %11 = vector.load %arg5[%c12, %c0_16] : memref<36x768xf32, #tpu.memory_space<vmem>>, vector<4x384xf32>
    tpu.vector_store %arg5[%c12, %c0_16], %10 {strides = array<i32>} : memref<36x768xf32, #tpu.memory_space<vmem>>, vector<4x384xf32>,
    %c0_17 = arith.constant 0 : index
    %c0_18 = arith.constant 0 : index
    %c0_19 = arith.constant 0 : index
    %c25 = arith.constant 25 : index
    %12 = vector.load %arg1[%c0_17, %c0_18, %c0_19, %c25] : memref<2x1x4x456xf32, #tpu.memory_space<vmem>>, vector<1x1x4x384xf32>
    %13 = vector.shape_cast %12 : vector<1x1x4x384xf32> to vector<4x384xf32>
    %c16 = arith.constant 16 : index
    %c0_20 = arith.constant 0 : index
    %14 = vector.load %arg5[%c16, %c0_20] : memref<36x768xf32, #tpu.memory_space<vmem>>, vector<4x384xf32>
    tpu.vector_store %arg5[%c16, %c0_20], %13 {strides = array<i32>} : memref<36x768xf32, #tpu.memory_space<vmem>>, vector<4x384xf32>,
    %c0_21 = arith.constant 0 : index
    %c0_22 = arith.constant 0 : index
    %c0_23 = arith.constant 0 : index
    %c26 = arith.constant 26 : index
    %15 = vector.load %arg1[%c0_21, %c0_22, %c0_23, %c26] : memref<2x1x4x456xf32, #tpu.memory_space<vmem>>, vector<1x1x4x384xf32>
    %16 = vector.shape_cast %15 : vector<1x1x4x384xf32> to vector<4x384xf32>
    %c20 = arith.constant 20 : index
    %c0_24 = arith.constant 0 : index
    %17 = vector.load %arg5[%c20, %c0_24] : memref<36x768xf32, #tpu.memory_space<vmem>>, vector<4x384xf32>
    tpu.vector_store %arg5[%c20, %c0_24], %16 {strides = array<i32>} : memref<36x768xf32, #tpu.memory_space<vmem>>, vector<4x384xf32>,
    %c0_25 = arith.constant 0 : index
    %c0_26 = arith.constant 0 : index
    %c0_27 = arith.constant 0 : index
    %c48 = arith.constant 48 : index
    %18 = vector.load %arg1[%c0_25, %c0_26, %c0_27, %c48] : memref<2x1x4x456xf32, #tpu.memory_space<vmem>>, vector<1x1x4x384xf32>
    %19 = vector.shape_cast %18 : vector<1x1x4x384xf32> to vector<4x384xf32>
    %c24_28 = arith.constant 24 : index
    %c0_29 = arith.constant 0 : index
    %20 = vector.load %arg5[%c24_28, %c0_29] : memref<36x768xf32, #tpu.memory_space<vmem>>, vector<4x384xf32>
    tpu.vector_store %arg5[%c24_28, %c0_29], %19 {strides = array<i32>} : memref<36x768xf32, #tpu.memory_space<vmem>>, vector<4x384xf32>,
    %c0_30 = arith.constant 0 : index
    %c0_31 = arith.constant 0 : index
    %c0_32 = arith.constant 0 : index
    %c49 = arith.constant 49 : index
    %21 = vector.load %arg1[%c0_30, %c0_31, %c0_32, %c49] : memref<2x1x4x456xf32, #tpu.memory_space<vmem>>, vector<1x1x4x384xf32>
    %22 = vector.shape_cast %21 : vector<1x1x4x384xf32> to vector<4x384xf32>
    %c28 = arith.constant 28 : index
    %c0_33 = arith.constant 0 : index
    %23 = vector.load %arg5[%c28, %c0_33] : memref<36x768xf32, #tpu.memory_space<vmem>>, vector<4x384xf32>
    tpu.vector_store %arg5[%c28, %c0_33], %22 {strides = array<i32>} : memref<36x768xf32, #tpu.memory_space<vmem>>, vector<4x384xf32>,
    %c0_34 = arith.constant 0 : index
    %c0_35 = arith.constant 0 : index
    %c0_36 = arith.constant 0 : index
    %c50 = arith.constant 50 : index
    %24 = vector.load %arg1[%c0_34, %c0_35, %c0_36, %c50] : memref<2x1x4x456xf32, #tpu.memory_space<vmem>>, vector<1x1x4x384xf32>
    %25 = vector.shape_cast %24 : vector<1x1x4x384xf32> to vector<4x384xf32>
    %c32 = arith.constant 32 : index
    %c0_37 = arith.constant 0 : index
    %26 = vector.load %arg5[%c32, %c0_37] : memref<36x768xf32, #tpu.memory_space<vmem>>, vector<4x384xf32>
    tpu.vector_store %arg5[%c32, %c0_37], %25 {strides = array<i32>} : memref<36x768xf32, #tpu.memory_space<vmem>>, vector<4x384xf32>,
    %c1_38 = arith.constant 1 : index
    %c0_39 = arith.constant 0 : index
    %c0_40 = arith.constant 0 : index
    %c0_41 = arith.constant 0 : index
    %27 = vector.load %arg1[%c1_38, %c0_39, %c0_40, %c0_41] : memref<2x1x4x456xf32, #tpu.memory_space<vmem>>, vector<1x1x4x384xf32>
    %28 = vector.shape_cast %27 : vector<1x1x4x384xf32> to vector<4x384xf32>
    %c0_42 = arith.constant 0 : index
    %c384 = arith.constant 384 : index
    %29 = vector.load %arg5[%c0_42, %c384] : memref<36x768xf32, #tpu.memory_space<vmem>>, vector<4x384xf32>
    tpu.vector_store %arg5[%c0_42, %c384], %28 {strides = array<i32>} : memref<36x768xf32, #tpu.memory_space<vmem>>, vector<4x384xf32>,
    %c1_43 = arith.constant 1 : index
    %c0_44 = arith.constant 0 : index
    %c0_45 = arith.constant 0 : index
    %c1_46 = arith.constant 1 : index
    %30 = vector.load %arg1[%c1_43, %c0_44, %c0_45, %c1_46] : memref<2x1x4x456xf32, #tpu.memory_space<vmem>>, vector<1x1x4x384xf32>
    %31 = vector.shape_cast %30 : vector<1x1x4x384xf32> to vector<4x384xf32>
    %c4_47 = arith.constant 4 : index
    %c384_48 = arith.constant 384 : index
    %32 = vector.load %arg5[%c4_47, %c384_48] : memref<36x768xf32, #tpu.memory_space<vmem>>, vector<4x384xf32>
    tpu.vector_store %arg5[%c4_47, %c384_48], %31 {strides = array<i32>} : memref<36x768xf32, #tpu.memory_space<vmem>>, vector<4x384xf32>,
    %c1_49 = arith.constant 1 : index
    %c0_50 = arith.constant 0 : index
    %c0_51 = arith.constant 0 : index
    %c2_52 = arith.constant 2 : index
    %33 = vector.load %arg1[%c1_49, %c0_50, %c0_51, %c2_52] : memref<2x1x4x456xf32, #tpu.memory_space<vmem>>, vector<1x1x4x384xf32>
    %34 = vector.shape_cast %33 : vector<1x1x4x384xf32> to vector<4x384xf32>
    %c8_53 = arith.constant 8 : index
    %c384_54 = arith.constant 384 : index
    %35 = vector.load %arg5[%c8_53, %c384_54] : memref<36x768xf32, #tpu.memory_space<vmem>>, vector<4x384xf32>
    tpu.vector_store %arg5[%c8_53, %c384_54], %34 {strides = array<i32>} : memref<36x768xf32, #tpu.memory_space<vmem>>, vector<4x384xf32>,
    %c1_55 = arith.constant 1 : index
    %c0_56 = arith.constant 0 : index
    %c0_57 = arith.constant 0 : index
    %c24_58 = arith.constant 24 : index
    %36 = vector.load %arg1[%c1_55, %c0_56, %c0_57, %c24_58] : memref<2x1x4x456xf32, #tpu.memory_space<vmem>>, vector<1x1x4x384xf32>
    %37 = vector.shape_cast %36 : vector<1x1x4x384xf32> to vector<4x384xf32>
    %c12_59 = arith.constant 12 : index
    %c384_60 = arith.constant 384 : index
    %38 = vector.load %arg5[%c12_59, %c384_60] : memref<36x768xf32, #tpu.memory_space<vmem>>, vector<4x384xf32>
    tpu.vector_store %arg5[%c12_59, %c384_60], %37 {strides = array<i32>} : memref<36x768xf32, #tpu.memory_space<vmem>>, vector<4x384xf32>,
    %c1_61 = arith.constant 1 : index
    %c0_62 = arith.constant 0 : index
    %c0_63 = arith.constant 0 : index
    %c25_64 = arith.constant 25 : index
    %39 = vector.load %arg1[%c1_61, %c0_62, %c0_63, %c25_64] : memref<2x1x4x456xf32, #tpu.memory_space<vmem>>, vector<1x1x4x384xf32>
    %40 = vector.shape_cast %39 : vector<1x1x4x384xf32> to vector<4x384xf32>
    %c16_65 = arith.constant 16 : index
    %c384_66 = arith.constant 384 : index
    %41 = vector.load %arg5[%c16_65, %c384_66] : memref<36x768xf32, #tpu.memory_space<vmem>>, vector<4x384xf32>
    tpu.vector_store %arg5[%c16_65, %c384_66], %40 {strides = array<i32>} : memref<36x768xf32, #tpu.memory_space<vmem>>, vector<4x384xf32>,
    %c1_67 = arith.constant 1 : index
    %c0_68 = arith.constant 0 : index
    %c0_69 = arith.constant 0 : index
    %c26_70 = arith.constant 26 : index
    %42 = vector.load %arg1[%c1_67, %c0_68, %c0_69, %c26_70] : memref<2x1x4x456xf32, #tpu.memory_space<vmem>>, vector<1x1x4x384xf32>
    %43 = vector.shape_cast %42 : vector<1x1x4x384xf32> to vector<4x384xf32>
    %c20_71 = arith.constant 20 : index
    %c384_72 = arith.constant 384 : index
    %44 = vector.load %arg5[%c20_71, %c384_72] : memref<36x768xf32, #tpu.memory_space<vmem>>, vector<4x384xf32>
    tpu.vector_store %arg5[%c20_71, %c384_72], %43 {strides = array<i32>} : memref<36x768xf32, #tpu.memory_space<vmem>>, vector<4x384xf32>,
    %c1_73 = arith.constant 1 : index
    %c0_74 = arith.constant 0 : index
    %c0_75 = arith.constant 0 : index
    %c48_76 = arith.constant 48 : index
    %45 = vector.load %arg1[%c1_73, %c0_74, %c0_75, %c48_76] : memref<2x1x4x456xf32, #tpu.memory_space<vmem>>, vector<1x1x4x384xf32>
    %46 = vector.shape_cast %45 : vector<1x1x4x384xf32> to vector<4x384xf32>
    %c24_77 = arith.constant 24 : index
    %c384_78 = arith.constant 384 : index
    %47 = vector.load %arg5[%c24_77, %c384_78] : memref<36x768xf32, #tpu.memory_space<vmem>>, vector<4x384xf32>
    tpu.vector_store %arg5[%c24_77, %c384_78], %46 {strides = array<i32>} : memref<36x768xf32, #tpu.memory_space<vmem>>, vector<4x384xf32>,
    %c1_79 = arith.constant 1 : index
    %c0_80 = arith.constant 0 : index
    %c0_81 = arith.constant 0 : index
    %c49_82 = arith.constant 49 : index
    %48 = vector.load %arg1[%c1_79, %c0_80, %c0_81, %c49_82] : memref<2x1x4x456xf32, #tpu.memory_space<vmem>>, vector<1x1x4x384xf32>
    %49 = vector.shape_cast %48 : vector<1x1x4x384xf32> to vector<4x384xf32>
    %c28_83 = arith.constant 28 : index
    %c384_84 = arith.constant 384 : index
    %50 = vector.load %arg5[%c28_83, %c384_84] : memref<36x768xf32, #tpu.memory_space<vmem>>, vector<4x384xf32>
    tpu.vector_store %arg5[%c28_83, %c384_84], %49 {strides = array<i32>} : memref<36x768xf32, #tpu.memory_space<vmem>>, vector<4x384xf32>,
    %c1_85 = arith.constant 1 : index
    %c0_86 = arith.constant 0 : index
    %c0_87 = arith.constant 0 : index
    %c50_88 = arith.constant 50 : index
    %51 = vector.load %arg1[%c1_85, %c0_86, %c0_87, %c50_88] : memref<2x1x4x456xf32, #tpu.memory_space<vmem>>, vector<1x1x4x384xf32>
    %52 = vector.shape_cast %51 : vector<1x1x4x384xf32> to vector<4x384xf32>
    %c32_89 = arith.constant 32 : index
    %c384_90 = arith.constant 384 : index
    %53 = vector.load %arg5[%c32_89, %c384_90] : memref<36x768xf32, #tpu.memory_space<vmem>>, vector<4x384xf32>
    tpu.vector_store %arg5[%c32_89, %c384_90], %52 {strides = array<i32>} : memref<36x768xf32, #tpu.memory_space<vmem>>, vector<4x384xf32>,
    %c0_91 = arith.constant 0 : index
    %c0_92 = arith.constant 0 : index
    %c0_93 = arith.constant 0 : index
    %54 = vector.load %arg2[%c0_91, %c0_92, %c0_93] : memref<1x4x36xf32, #tpu.memory_space<vmem>>, vector<1x4x36xf32>
    %55 = vector.shape_cast %54 : vector<1x4x36xf32> to vector<4x36xf32>
    %c0_94 = arith.constant 0 : index
    %c0_95 = arith.constant 0 : index
    %c0_96 = arith.constant 0 : index
    %56 = vector.load %arg3[%c0_94, %c0_95, %c0_96] : memref<1x4x1xf32, #tpu.memory_space<vmem>>, vector<1x4x1xf32>
    %57 = vector.shape_cast %56 : vector<1x4x1xf32> to vector<4x1xf32>
    %c0_97 = arith.constant 0 : index
    %c0_98 = arith.constant 0 : index
    %58 = vector.load %arg5[%c0_97, %c0_98] : memref<36x768xf32, #tpu.memory_space<vmem>>, vector<36x768xf32>
    %cst = arith.constant dense<0.000000e+00> : vector<4x768xf32>
    %59 = tpu.matmul %55, %58, %cst {dimension_numbers = #tpu.dot_dimension_numbers<[1], [0], [0], [1], [0, 0, 1, 1], [], []>} : vector<4x36xf32>, vector<36x768xf32>, vector<4x768xf32> -> vector<4x768xf32>
    %60 = vector.broadcast %57 : vector<4x1xf32> to vector<4x768xf32>
    %61 = arith.addf %59, %60 : vector<4x768xf32>
    %c0_99 = arith.constant 0 : index
    %c0_100 = arith.constant 0 : index
    %c0_101 = arith.constant 0 : index
    %62 = vector.load %arg4[%c0_99, %c0_100, %c0_101] : memref<1x4x768xf32, #tpu.memory_space<vmem>>, vector<1x4x768xf32>
    %63 = vector.shape_cast %62 : vector<1x4x768xf32> to vector<4x768xf32>
    %64 = vector.shape_cast %61 : vector<4x768xf32> to vector<1x4x768xf32>
    tpu.vector_store %arg4[%c0_99, %c0_100, %c0_101], %64 {strides = array<i32>} : memref<1x4x768xf32, #tpu.memory_space<vmem>>, vector<1x4x768xf32>,
    return
  }
  func.func @transform_0(%arg0: i32) -> (i32, i32, i32, i32) {
    %c0_i32 = arith.constant 0 : i32
    %c0_i32_0 = arith.constant 0 : i32
    %c0_i32_1 = arith.constant 0 : i32
    %c0_i32_2 = arith.constant 0 : i32
    return %c0_i32, %arg0, %c0_i32_0, %c0_i32_1 : i32, i32, i32, i32
  }
  func.func @transform_1(%arg0: i32) -> (i32, i32, i32) {
    %c0_i32 = arith.constant 0 : i32
    %c0_i32_0 = arith.constant 0 : i32
    %c0_i32_1 = arith.constant 0 : i32
    return %arg0, %c0_i32, %c0_i32_0 : i32, i32, i32
  }
  func.func @transform_2(%arg0: i32) -> (i32, i32, i32) {
    %c0_i32 = arith.constant 0 : i32
    %c0_i32_0 = arith.constant 0 : i32
    %c0_i32_1 = arith.constant 0 : i32
    return %arg0, %c0_i32, %c0_i32_0 : i32, i32, i32
  }
  func.func @transform_3(%arg0: i32) -> (i32, i32, i32) {
    %c0_i32 = arith.constant 0 : i32
    %c0_i32_0 = arith.constant 0 : i32
    %c0_i32_1 = arith.constant 0 : i32
    return %arg0, %c0_i32, %c0_i32_0 : i32, i32, i32
  }
}

</mosaic_0001>

<llo_original>
// kernel: tpu_custom_call.1
$region0: #{tpu_custom_call.1}
  #allocation0 [shape = 'u32[]', space=smem, size = 0x4, offset = 0x4, fixed_abs, tag = 'smem constant byte address 0x4 - core index']
  #allocation1 [shape = 'u32[144,128]{1,0:T(1,128)}', space=vmem, size = 0x12000, scoped, tag = 'internal scratch']
  #allocation2 [shape = 'f32[36,768]{1,0:T(8,128)}', space=vmem, size = 0x1e000, scoped, tag = 'scratch operand']
  %s0 = inlined_call_operand.hbm [shape: f32[2,2,4,456], index: 0, kind: input, shape index: {}]
  %s1 = inlined_call_operand.vmem [shape: f32[2,4,36], index: 1, kind: input, shape index: {}]
  %s2 = inlined_call_operand.vmem [shape: f32[2,4,1], index: 2, kind: input, shape index: {}]
  %s3 = inlined_call_operand.hbm [shape: f32[2,4,768], index: 3, kind: output, shape index: {}]
  %s4 = sld [smem:[#allocation0]]
  $region49: #{tpu_custom_call.1} parent=0
    _
  %s6 = ssub.s32 1, %s4
  %s7 = scalar_select 0, %s6, %s4
  $region1: #{tpu_custom_call.1} parent=0
    #allocation3 [shape = 'u8[32768]{0}', space=vmem, size = 0x8000, scoped, tag = 'input window, operand 0']
    #allocation4 [shape = 's32[2]{0}', space=sflag, size = 0x8, scoped, tag = 'scoped memory for tpu_custom_call.1']
    #allocation5 [shape = 's32[2]{0}', space=sflag, size = 0x8, scoped, tag = 'scoped memory for tpu_custom_call.1']
    #allocation6 [shape = 'u8[24576]{0}', space=vmem, size = 0x6000, scoped, tag = 'output window, operand 0']
    %8 = vsyncpa [#allocation4], 0
    %s9 = scalar_lea.sflag [#allocation4], 1
    %10 = vsyncpa %s9, 0
    %11 = vsyncpa [#allocation5], 0
    %s12 = scalar_lea.sflag [#allocation5], 1
    %13 = vsyncpa %s12, 0
    loop: start=0, step=1, limit=4
    $region2: #{tpu_custom_call.1} parent=1 // loop_pre_header
      _
    $region3: #{tpu_custom_call.1} parent=1 // loop_header
      %s15 = sphi 0, %s19
      %p16 = scmp.ge.s32.totalorder %s15, 4
      %s25 = sphi 0, %s27
      %s28 = sphi 0, %s25
      %s29 = sphi 0, %s28
      %s45 = sphi 0, %s29
      %s51 = sphi 0, %s53
      %s54 = sphi 0, %s51
      %s55 = sphi 0, %s54
      %s71 = sphi 0, %s55
      %s77 = sphi 0, %s79
      %s80 = sphi 0, %s77
      %s81 = sphi 0, %s80
      %s97 = sphi 0, %s81
      %s103 = sphi 0, %s105
      %s106 = sphi 0, %s103
      %s107 = sphi 0, %s106
      %s123 = sphi 0, %s107
    $region4: #{tpu_custom_call.1} parent=1 // loop_header_branch
      %18 = sbr.rel (%p16) target = $region8
    $region5: #{tpu_custom_call.1} parent=1 // loop_body
      %s20 = ssub.s32 %s15, 1
      %s21 = ssub.s32 %s15, 2
      %s22 = sadd.s32 %s15, 1
      %s23 = ssub.s32 %s15, %s22
      %p24 = scmp.eq.s32.totalorder %s23, 0
      %s26 = sadd.s32 %s25, 1
      %s27 = scalar_select %p24, %s25, %s26
      %p30 = pneg %p24
      %p31 = scmp.eq.s32.totalorder %s15, 1
      %p32 = por %p30, %p31
      %p33 = scmp.ne.s32.totalorder %s25, %s28
      %p34 = scmp.eq.s32.totalorder %s15, 0
      %p35 = por %p33, %p34
      %p36 = scmp.ne.s32.totalorder %s25, %s28
      %p37 = scmp.eq.s32.totalorder %s20, 1
      %p38 = por %p36, %p37
      %p39 = scmp.ne.s32.totalorder %s28, %s29
      %p40 = scmp.eq.s32.totalorder %s20, 0
      %p41 = por %p39, %p40
      %p42 = scmp.ne.s32.totalorder %s28, %s29
      %p43 = scmp.eq.s32.totalorder %s21, 1
      %p44 = por %p42, %p43
      %p46 = scmp.ne.s32.totalorder %s29, %s45
      %p47 = scmp.eq.s32.totalorder %s21, 0
      %p48 = por %p46, %p47
      %s49 = ssub.s32 %s15, %s22
      %p50 = scmp.eq.s32.totalorder %s49, 0
      %s52 = sadd.s32 %s51, 1
      %s53 = scalar_select %p50, %s51, %s52
      %p56 = pneg %p50
      %p57 = scmp.eq.s32.totalorder %s15, 1
      %p58 = por %p56, %p57
      %p59 = scmp.ne.s32.totalorder %s51, %s54
      %p60 = scmp.eq.s32.totalorder %s15, 0
      %p61 = por %p59, %p60
      %p62 = scmp.ne.s32.totalorder %s51, %s54
      %p63 = scmp.eq.s32.totalorder %s20, 1
      %p64 = por %p62, %p63
      %p65 = scmp.ne.s32.totalorder %s54, %s55
      %p66 = scmp.eq.s32.totalorder %s20, 0
      %p67 = por %p65, %p66
      %p68 = scmp.ne.s32.totalorder %s54, %s55
      %p69 = scmp.eq.s32.totalorder %s21, 1
      %p70 = por %p68, %p69
      %p72 = scmp.ne.s32.totalorder %s55, %s71
      %p73 = scmp.eq.s32.totalorder %s21, 0
      %p74 = por %p72, %p73
      %s75 = ssub.s32 %s15, %s22
      %p76 = scmp.eq.s32.totalorder %s75, 0
      %s78 = sadd.s32 %s77, 1
      %s79 = scalar_select %p76, %s77, %s78
      %p82 = pneg %p76
      %p83 = scmp.eq.s32.totalorder %s15, 1
      %p84 = por %p82, %p83
      %p85 = scmp.ne.s32.totalorder %s77, %s80
      %p86 = scmp.eq.s32.totalorder %s15, 0
      %p87 = por %p85, %p86
      %p88 = scmp.ne.s32.totalorder %s77, %s80
      %p89 = scmp.eq.s32.totalorder %s20, 1
      %p90 = por %p88, %p89
      %p91 = scmp.ne.s32.totalorder %s80, %s81
      %p92 = scmp.eq.s32.totalorder %s20, 0
      %p93 = por %p91, %p92
      %p94 = scmp.ne.s32.totalorder %s80, %s81
      %p95 = scmp.eq.s32.totalorder %s21, 1
      %p96 = por %p94, %p95
      %p98 = scmp.ne.s32.totalorder %s81, %s97
      %p99 = scmp.eq.s32.totalorder %s21, 0
      %p100 = por %p98, %p99
      %s101 = ssub.s32 %s15, %s22
      %p102 = scmp.eq.s32.totalorder %s101, 0
      %s104 = sadd.s32 %s103, 1
      %s105 = scalar_select %p102, %s103, %s104
      %p108 = pneg %p102
      %p109 = scmp.eq.s32.totalorder %s15, 1
      %p110 = por %p108, %p109
      %p111 = scmp.ne.s32.totalorder %s103, %s106
      %p112 = scmp.eq.s32.totalorder %s15, 0
      %p113 = por %p111, %p112
      %p114 = scmp.ne.s32.totalorder %s103, %s106
      %p115 = scmp.eq.s32.totalorder %s20, 1
      %p116 = por %p114, %p115
      %p117 = scmp.ne.s32.totalorder %s106, %s107
      %p118 = scmp.eq.s32.totalorder %s20, 0
      %p119 = por %p117, %p118
      %p120 = scmp.ne.s32.totalorder %s106, %s107
      %p121 = scmp.eq.s32.totalorder %s21, 1
      %p122 = por %p120, %p121
      %p124 = scmp.ne.s32.totalorder %s107, %s123
      %p125 = scmp.eq.s32.totalorder %s21, 0
      %p126 = por %p124, %p125
      %p127 = scmp.le.s32.totalorder 1, %s15
      %p128 = scmp.lt.s32.totalorder %s15, 3
      %p129 = pnand %p127, %p128
      %p130 = pneg %p129
      // Predicated region
      $region9: #{tpu_custom_call.1} parent=5 // pred_check
        _
      $region10: #{tpu_custom_call.1} parent=5 // pred_check_branch
        %132 = sbr.rel (%p129) target = $region12
      $region11: #{tpu_custom_call.1} parent=5 // pred_region
        %s133 = ssub.s32 %s15, 1
      $region12: #{tpu_custom_call.1} parent=5 // pred_fallthru
        _
      %p134 = scmp.lt.s32.totalorder %s15, 2
      // Predicated region
      $region13: #{tpu_custom_call.1} parent=5 // pred_check
        %p135 = pneg %p134
      $region14: #{tpu_custom_call.1} parent=5 // pred_check_branch
        %137 = sbr.rel (%p135) target = $region16
      $region15: #{tpu_custom_call.1} parent=5 // pred_region
        // Predicated region
        $region17: #{tpu_custom_call.1} parent=15 // pred_check
          %p138 = pneg %p35
        $region18: #{tpu_custom_call.1} parent=15 // pred_check_branch
          %140 = sbr.rel (%p138) target = $region20
        $region19: #{tpu_custom_call.1} parent=15 // pred_region
          %s141 = sand.u32 %s25, 1
          %s142 = scalar_lea.sflag [#allocation4], %s141
          %s143 = sand.u32 %s25, 1
          %s144 = smul.addr %s143, 32
          %s145 = scalar_lea.vmem [#allocation3], %s144
          %s147 = ssub.s32 512, 512
          %148 = vsyncadd %s142, %s147
          %s149 = smul.addr %s15, 4
          %s150 = smul.addr %s149, 64
          %s151 = scalar_lea.hbm %s0, %s150
          %s152 = sshll.u32 %s145, 4
          %s153 = int_to_ptr.vmem [resolvable:$true] %s152
          %158 = dma.hbm_to_vmem [thread:$0]  %s151, 512, %s153, %s142, 512, 256, 16
        $region20: #{tpu_custom_call.1} parent=15 // pred_fallthru
          _
        // Predicated region
        $region21: #{tpu_custom_call.1} parent=15 // pred_check
          %p159 = pneg %p61
        $region22: #{tpu_custom_call.1} parent=15 // pred_check_branch
          %161 = sbr.rel (%p159) target = $region24
        $region23: #{tpu_custom_call.1} parent=15 // pred_region
          %p162 = scmp.lt.s32.totalorder %s15, 1
          %s163 = scalar_select %p162, %s15, 1
          %s164 = smul.addr %s163, 4
          %s165 = scalar_lea.vmem %s1, %s164
        $region24: #{tpu_custom_call.1} parent=15 // pred_fallthru
          _
        // Predicated region
        $region25: #{tpu_custom_call.1} parent=15 // pred_check
          %p166 = pneg %p87
        $region26: #{tpu_custom_call.1} parent=15 // pred_check_branch
          %168 = sbr.rel (%p166) target = $region28
        $region27: #{tpu_custom_call.1} parent=15 // pred_region
          %p169 = scmp.lt.s32.totalorder %s15, 1
          %s170 = scalar_select %p169, %s15, 1
          %s171 = smul.addr %s170, 4
          %s172 = scalar_lea.vmem %s2, %s171
        $region28: #{tpu_custom_call.1} parent=15 // pred_fallthru
          _
      $region16: #{tpu_custom_call.1} parent=5 // pred_fallthru
        _
      %p173 = scmp.le.s32.totalorder 1, %s15
      %p174 = scmp.lt.s32.totalorder %s15, 3
      %p175 = pnand %p173, %p174
      %p176 = pneg %p175
      // Predicated region
      $region29: #{tpu_custom_call.1} parent=5 // pred_check
        _
      $region30: #{tpu_custom_call.1} parent=5 // pred_check_branch
        %178 = sbr.rel (%p175) target = $region32
      $region31: #{tpu_custom_call.1} parent=5 // pred_region
        %s179 = ssub.s32 %s15, 1
        %s180 = sand.u32 %s28, 1
        %s181 = scalar_lea.sflag [#allocation4], %s180
        %s182 = sand.u32 %s28, 1
        %s183 = smul.addr %s182, 32
        %s184 = scalar_lea.vmem [#allocation3], %s183
        // Predicated region
        $region33: #{tpu_custom_call.1} parent=31 // pred_check
          %p185 = pneg %p41
        $region34: #{tpu_custom_call.1} parent=31 // pred_check_branch
          %187 = sbr.rel (%p185) target = $region36
        $region35: #{tpu_custom_call.1} parent=31 // pred_region
          %188 = dma.done %s181, 512
        $region36: #{tpu_custom_call.1} parent=31 // pred_fallthru
          _
        %s189 = sand.u32 %s28, 1
        %s190 = scalar_lea.sflag [#allocation4], %s189
        %s191 = sand.u32 %s28, 1
        %s192 = smul.addr %s191, 32
        %s193 = scalar_lea.vmem [#allocation3], %s192
        %p194 = pneg %p41
        %p195 = pneg %p38
        %p196 = scmp.lt.s32.totalorder %s20, 1
        %s197 = scalar_select %p196, %s20, 1
        %s198 = smul.addr %s197, 4
        %s199 = scalar_lea.vmem %s1, %s198
        %p200 = pneg %p67
        %p201 = pneg %p64
        %p202 = scmp.lt.s32.totalorder %s20, 1
        %s203 = scalar_select %p202, %s20, 1
        %s204 = smul.addr %s203, 4
        %s205 = scalar_lea.vmem %s2, %s204
        %p206 = pneg %p93
        %p207 = pneg %p90
        %p208 = pneg %p119
        %p209 = pneg %p116
        %s210 = sand.u32 %s106, 1
        %s211 = scalar_lea.sflag [#allocation5], %s210
        %s212 = sand.u32 %s106, 1
        %s213 = smul.addr %s212, 24
        %s214 = scalar_lea.vmem [#allocation6], %s213
        %p215 = scmp.lt.s32.totalorder %s20, 1
        %s216 = scalar_select %p215, %s20, 1
        %s217 = smul.addr %s216, 4
        %s218 = scalar_lea.vmem %s1, %s217
        %p219 = scmp.lt.s32.totalorder %s20, 1
        %s220 = scalar_select %p219, %s20, 1
        %s221 = smul.addr %s220, 4
        %s222 = scalar_lea.vmem %s2, %s221
        %v223 = vld [vmem:[%s184] sm:$0xff]
        %v224 = vld [vmem:[%s184 + $0x8] sm:$0xf]
        %v226 = vcombine.high %v223, %v223
        %228 = vst [vmem:[#allocation2] sm:$0xf] %v223
        %229 = vst [vmem:[#allocation2 + $0x8] sm:$0xf] %v226
        %230 = vst [vmem:[#allocation2 + $0x10] sm:$0xf] %v224
        %v231 = vld [vmem:[%s184] sm:$0xff]
        %v232 = vld [vmem:[%s184 + $0x8] sm:$0xff]
        %v235 = vcombine.low %v231, %v231
        %v236 = vcombine.low %v232, %v232
        %237 = vrot.lane.b32.xlu0 %v235, 127
        %v238 = vpop.permute.xlu0 %237
        %239 = vrot.lane.b32.xlu0 %v231, 127
        %v240 = vpop.permute.xlu0 %239
        %241 = vrot.lane.b32.xlu0 %v236, 127
        %v242 = vpop.permute.xlu0 %241
        %243 = vrot.lane.b32.xlu0 %v232, 127
        %v244 = vpop.permute.xlu0 %243
        %vm245 = vcmask 1039360
        %v246 = vsel %vm245, %v238, %v240
        %v247 = vsel %vm245, %v240, %v242
        %v248 = vsel %vm245, %v242, %v244
        %252 = vst [vmem:[#allocation2] sm:$0xf0] %v246
        %253 = vst [vmem:[#allocation2 + $0x8] sm:$0xf0] %v247
        %254 = vst [vmem:[#allocation2 + $0x10] sm:$0xf0] %v248
        %v255 = vld [vmem:[%s184] sm:$0xff]
        %v256 = vld [vmem:[%s184 + $0x8] sm:$0xff]
        %v259 = vcombine.high %v255, %v255
        %v260 = vcombine.high %v256, %v256
        %261 = vrot.lane.b32.xlu0 %v255, 126
        %v262 = vpop.permute.xlu0 %261
        %263 = vrot.lane.b32.xlu0 %v259, 126
        %v264 = vpop.permute.xlu0 %263
        %265 = vrot.lane.b32.xlu0 %v256, 126
        %v266 = vpop.permute.xlu0 %265
        %267 = vrot.lane.b32.xlu0 %v260, 126
        %v268 = vpop.permute.xlu0 %267
        %vm269 = vcmask 1031168
        %v270 = vsel %vm269, %v262, %v264
        %v271 = vsel %vm269, %v264, %v266
        %v272 = vsel %vm269, %v266, %v268
        %276 = vst [vmem:[#allocation2 + $0x30] sm:$0xf] %v270
        %277 = vst [vmem:[#allocation2 + $0x38] sm:$0xf] %v271
        %278 = vst [vmem:[#allocation2 + $0x40] sm:$0xf] %v272
        %v279 = vld [vmem:[%s184] sm:$0xff]
        %v280 = vld [vmem:[%s184 + $0x8] sm:$0xff]
        %v283 = vcombine.low %v279, %v279
        %v284 = vcombine.low %v280, %v280
        %285 = vrot.lane.b32.xlu0 %v283, 104
        %v286 = vpop.permute.xlu0 %285
        %287 = vrot.lane.b32.xlu0 %v279, 104
        %v288 = vpop.permute.xlu0 %287
        %289 = vrot.lane.b32.xlu0 %v284, 104
        %v290 = vpop.permute.xlu0 %289
        %291 = vrot.lane.b32.xlu0 %v280, 104
        %v292 = vpop.permute.xlu0 %291
        %vm293 = vcmask 850944
        %v294 = vsel %vm293, %v286, %v288
        %v295 = vsel %vm293, %v288, %v290
        %v296 = vsel %vm293, %v290, %v292
        %300 = vst [vmem:[#allocation2 + $0x30] sm:$0xf0] %v294
        %301 = vst [vmem:[#allocation2 + $0x38] sm:$0xf0] %v295
        %302 = vst [vmem:[#allocation2 + $0x40] sm:$0xf0] %v296
        %v303 = vld [vmem:[%s184] sm:$0xff]
        %v304 = vld [vmem:[%s184 + $0x8] sm:$0xff]
        %v307 = vcombine.high %v303, %v303
        %v308 = vcombine.high %v304, %v304
        %309 = vrot.lane.b32.xlu0 %v303, 103
        %v310 = vpop.permute.xlu0 %309
        %311 = vrot.lane.b32.xlu0 %v307, 103
        %v312 = vpop.permute.xlu0 %311
        %313 = vrot.lane.b32.xlu0 %v304, 103
        %v314 = vpop.permute.xlu0 %313
        %315 = vrot.lane.b32.xlu0 %v308, 103
        %v316 = vpop.permute.xlu0 %315
        %vm317 = vcmask 842752
        %v318 = vsel %vm317, %v310, %v312
        %v319 = vsel %vm317, %v312, %v314
        %v320 = vsel %vm317, %v314, %v316
        %324 = vst [vmem:[#allocation2 + $0x60] sm:$0xf] %v318
        %325 = vst [vmem:[#allocation2 + $0x68] sm:$0xf] %v319
        %326 = vst [vmem:[#allocation2 + $0x70] sm:$0xf] %v320
        %v327 = vld [vmem:[%s184] sm:$0xff]
        %v328 = vld [vmem:[%s184 + $0x8] sm:$0xff]
        %v331 = vcombine.low %v327, %v327
        %v332 = vcombine.low %v328, %v328
        %333 = vrot.lane.b32.xlu0 %v331, 102
        %v334 = vpop.permute.xlu0 %333
        %335 = vrot.lane.b32.xlu0 %v327, 102
        %v336 = vpop.permute.xlu0 %335
        %337 = vrot.lane.b32.xlu0 %v332, 102
        %v338 = vpop.permute.xlu0 %337
        %339 = vrot.lane.b32.xlu0 %v328, 102
        %v340 = vpop.permute.xlu0 %339
        %vm341 = vcmask 834560
        %v342 = vsel %vm341, %v334, %v336
        %v343 = vsel %vm341, %v336, %v338
        %v344 = vsel %vm341, %v338, %v340
        %348 = vst [vmem:[#allocation2 + $0x60] sm:$0xf0] %v342
        %349 = vst [vmem:[#allocation2 + $0x68] sm:$0xf0] %v343
        %350 = vst [vmem:[#allocation2 + $0x70] sm:$0xf0] %v344
        %v351 = vld [vmem:[%s184] sm:$0xff]
        %v352 = vld [vmem:[%s184 + $0x8] sm:$0xff]
        %v355 = vcombine.high %v351, %v351
        %v356 = vcombine.high %v352, %v352
        %357 = vrot.lane.b32.xlu0 %v351, 80
        %v358 = vpop.permute.xlu0 %357
        %359 = vrot.lane.b32.xlu0 %v355, 80
        %v360 = vpop.permute.xlu0 %359
        %361 = vrot.lane.b32.xlu0 %v352, 80
        %v362 = vpop.permute.xlu0 %361
        %363 = vrot.lane.b32.xlu0 %v356, 80
        %v364 = vpop.permute.xlu0 %363
        %vm365 = vcmask 654336
        %v366 = vsel %vm365, %v358, %v360
        %v367 = vsel %vm365, %v360, %v362
        %v368 = vsel %vm365, %v362, %v364
        %372 = vst [vmem:[#allocation2 + $0x90] sm:$0xf] %v366
        %373 = vst [vmem:[#allocation2 + $0x98] sm:$0xf] %v367
        %374 = vst [vmem:[#allocation2 + $0xa0] sm:$0xf] %v368
        %v375 = vld [vmem:[%s184] sm:$0xff]
        %v376 = vld [vmem:[%s184 + $0x8] sm:$0xff]
        %v379 = vcombine.low %v375, %v375
        %v380 = vcombine.low %v376, %v376
        %381 = vrot.lane.b32.xlu0 %v379, 79
        %v382 = vpop.permute.xlu0 %381
        %383 = vrot.lane.b32.xlu0 %v375, 79
        %v384 = vpop.permute.xlu0 %383
        %385 = vrot.lane.b32.xlu0 %v380, 79
        %v386 = vpop.permute.xlu0 %385
        %387 = vrot.lane.b32.xlu0 %v376, 79
        %v388 = vpop.permute.xlu0 %387
        %vm389 = vcmask 646144
        %v390 = vsel %vm389, %v382, %v384
        %v391 = vsel %vm389, %v384, %v386
        %v392 = vsel %vm389, %v386, %v388
        %396 = vst [vmem:[#allocation2 + $0x90] sm:$0xf0] %v390
        %397 = vst [vmem:[#allocation2 + $0x98] sm:$0xf0] %v391
        %398 = vst [vmem:[#allocation2 + $0xa0] sm:$0xf0] %v392
        %v399 = vld [vmem:[%s184] sm:$0xff]
        %v400 = vld [vmem:[%s184 + $0x8] sm:$0xff]
        %v403 = vcombine.high %v399, %v399
        %v404 = vcombine.high %v400, %v400
        %405 = vrot.lane.b32.xlu0 %v399, 78
        %v406 = vpop.permute.xlu0 %405
        %407 = vrot.lane.b32.xlu0 %v403, 78
        %v408 = vpop.permute.xlu0 %407
        %409 = vrot.lane.b32.xlu0 %v400, 78
        %v410 = vpop.permute.xlu0 %409
        %411 = vrot.lane.b32.xlu0 %v404, 78
        %v412 = vpop.permute.xlu0 %411
        %vm413 = vcmask 637952
        %v414 = vsel %vm413, %v406, %v408
        %v415 = vsel %vm413, %v408, %v410
        %v416 = vsel %vm413, %v410, %v412
        %420 = vst [vmem:[#allocation2 + $0xc0] sm:$0xf] %v414
        %421 = vst [vmem:[#allocation2 + $0xc8] sm:$0xf] %v415
        %422 = vst [vmem:[#allocation2 + $0xd0] sm:$0xf] %v416
        %s423 = scalar_lea.vmem %s184, 16 [#allocation3]
        %v424 = vld [vmem:[%s423] sm:$0xff]
        %v425 = vld [vmem:[%s423 + $0x8] sm:$0xf]
        %v427 = vcombine.high %v424, %v424
        %429 = vst [vmem:[#allocation2 + $0x18] sm:$0xf] %v424
        %430 = vst [vmem:[#allocation2 + $0x20] sm:$0xf] %v427
        %431 = vst [vmem:[#allocation2 + $0x28] sm:$0xf] %v425
        %v432 = vld [vmem:[%s423] sm:$0xff]
        %v433 = vld [vmem:[%s423 + $0x8] sm:$0xff]
        %v436 = vcombine.low %v432, %v432
        %v437 = vcombine.low %v433, %v433
        %438 = vrot.lane.b32.xlu0 %v436, 127
        %v439 = vpop.permute.xlu0 %438
        %440 = vrot.lane.b32.xlu0 %v432, 127
        %v441 = vpop.permute.xlu0 %440
        %442 = vrot.lane.b32.xlu0 %v437, 127
        %v443 = vpop.permute.xlu0 %442
        %444 = vrot.lane.b32.xlu0 %v433, 127
        %v445 = vpop.permute.xlu0 %444
        %v446 = vsel %vm245, %v439, %v441
        %v447 = vsel %vm245, %v441, %v443
        %v448 = vsel %vm245, %v443, %v445
        %452 = vst [vmem:[#allocation2 + $0x18] sm:$0xf0] %v446
        %453 = vst [vmem:[#allocation2 + $0x20] sm:$0xf0] %v447
        %454 = vst [vmem:[#allocation2 + $0x28] sm:$0xf0] %v448
        %v455 = vld [vmem:[%s423] sm:$0xff]
        %v456 = vld [vmem:[%s423 + $0x8] sm:$0xff]
        %v459 = vcombine.high %v455, %v455
        %v460 = vcombine.high %v456, %v456
        %461 = vrot.lane.b32.xlu0 %v455, 126
        %v462 = vpop.permute.xlu0 %461
        %463 = vrot.lane.b32.xlu0 %v459, 126
        %v464 = vpop.permute.xlu0 %463
        %465 = vrot.lane.b32.xlu0 %v456, 126
        %v466 = vpop.permute.xlu0 %465
        %467 = vrot.lane.b32.xlu0 %v460, 126
        %v468 = vpop.permute.xlu0 %467
        %v469 = vsel %vm269, %v462, %v464
        %v470 = vsel %vm269, %v464, %v466
        %v471 = vsel %vm269, %v466, %v468
        %475 = vst [vmem:[#allocation2 + $0x48] sm:$0xf] %v469
        %476 = vst [vmem:[#allocation2 + $0x50] sm:$0xf] %v470
        %477 = vst [vmem:[#allocation2 + $0x58] sm:$0xf] %v471
        %v478 = vld [vmem:[%s423] sm:$0xff]
        %v479 = vld [vmem:[%s423 + $0x8] sm:$0xff]
        %v482 = vcombine.low %v478, %v478
        %v483 = vcombine.low %v479, %v479
        %484 = vrot.lane.b32.xlu0 %v482, 104
        %v485 = vpop.permute.xlu0 %484
        %486 = vrot.lane.b32.xlu0 %v478, 104
        %v487 = vpop.permute.xlu0 %486
        %488 = vrot.lane.b32.xlu0 %v483, 104
        %v489 = vpop.permute.xlu0 %488
        %490 = vrot.lane.b32.xlu0 %v479, 104
        %v491 = vpop.permute.xlu0 %490
        %v492 = vsel %vm293, %v485, %v487
        %v493 = vsel %vm293, %v487, %v489
        %v494 = vsel %vm293, %v489, %v491
        %498 = vst [vmem:[#allocation2 + $0x48] sm:$0xf0] %v492
        %499 = vst [vmem:[#allocation2 + $0x50] sm:$0xf0] %v493
        %500 = vst [vmem:[#allocation2 + $0x58] sm:$0xf0] %v494
        %v501 = vld [vmem:[%s423] sm:$0xff]
        %v502 = vld [vmem:[%s423 + $0x8] sm:$0xff]
        %v505 = vcombine.high %v501, %v501
        %v506 = vcombine.high %v502, %v502
        %507 = vrot.lane.b32.xlu0 %v501, 103
        %v508 = vpop.permute.xlu0 %507
        %509 = vrot.lane.b32.xlu0 %v505, 103
        %v510 = vpop.permute.xlu0 %509
        %511 = vrot.lane.b32.xlu0 %v502, 103
        %v512 = vpop.permute.xlu0 %511
        %513 = vrot.lane.b32.xlu0 %v506, 103
        %v514 = vpop.permute.xlu0 %513
        %v515 = vsel %vm317, %v508, %v510
        %v516 = vsel %vm317, %v510, %v512
        %v517 = vsel %vm317, %v512, %v514
        %521 = vst [vmem:[#allocation2 + $0x78] sm:$0xf] %v515
        %522 = vst [vmem:[#allocation2 + $0x80] sm:$0xf] %v516
        %523 = vst [vmem:[#allocation2 + $0x88] sm:$0xf] %v517
        %v524 = vld [vmem:[%s423] sm:$0xff]
        %v525 = vld [vmem:[%s423 + $0x8] sm:$0xff]
        %v528 = vcombine.low %v524, %v524
        %v529 = vcombine.low %v525, %v525
        %530 = vrot.lane.b32.xlu0 %v528, 102
        %v531 = vpop.permute.xlu0 %530
        %532 = vrot.lane.b32.xlu0 %v524, 102
        %v533 = vpop.permute.xlu0 %532
        %534 = vrot.lane.b32.xlu0 %v529, 102
        %v535 = vpop.permute.xlu0 %534
        %536 = vrot.lane.b32.xlu0 %v525, 102
        %v537 = vpop.permute.xlu0 %536
        %v538 = vsel %vm341, %v531, %v533
        %v539 = vsel %vm341, %v533, %v535
        %v540 = vsel %vm341, %v535, %v537
        %544 = vst [vmem:[#allocation2 + $0x78] sm:$0xf0] %v538
        %545 = vst [vmem:[#allocation2 + $0x80] sm:$0xf0] %v539
        %546 = vst [vmem:[#allocation2 + $0x88] sm:$0xf0] %v540
        %v547 = vld [vmem:[%s423] sm:$0xff]
        %v548 = vld [vmem:[%s423 + $0x8] sm:$0xff]
        %v551 = vcombine.high %v547, %v547
        %v552 = vcombine.high %v548, %v548
        %553 = vrot.lane.b32.xlu0 %v547, 80
        %v554 = vpop.permute.xlu0 %553
        %555 = vrot.lane.b32.xlu0 %v551, 80
        %v556 = vpop.permute.xlu0 %555
        %557 = vrot.lane.b32.xlu0 %v548, 80
        %v558 = vpop.permute.xlu0 %557
        %559 = vrot.lane.b32.xlu0 %v552, 80
        %v560 = vpop.permute.xlu0 %559
        %v561 = vsel %vm365, %v554, %v556
        %v562 = vsel %vm365, %v556, %v558
        %v563 = vsel %vm365, %v558, %v560
        %567 = vst [vmem:[#allocation2 + $0xa8] sm:$0xf] %v561
        %568 = vst [vmem:[#allocation2 + $0xb0] sm:$0xf] %v562
        %569 = vst [vmem:[#allocation2 + $0xb8] sm:$0xf] %v563
        %v570 = vld [vmem:[%s423] sm:$0xff]
        %v571 = vld [vmem:[%s423 + $0x8] sm:$0xff]
        %v574 = vcombine.low %v570, %v570
        %v575 = vcombine.low %v571, %v571
        %576 = vrot.lane.b32.xlu0 %v574, 79
        %v577 = vpop.permute.xlu0 %576
        %578 = vrot.lane.b32.xlu0 %v570, 79
        %v579 = vpop.permute.xlu0 %578
        %580 = vrot.lane.b32.xlu0 %v575, 79
        %v581 = vpop.permute.xlu0 %580
        %582 = vrot.lane.b32.xlu0 %v571, 79
        %v583 = vpop.permute.xlu0 %582
        %v584 = vsel %vm389, %v577, %v579
        %v585 = vsel %vm389, %v579, %v581
        %v586 = vsel %vm389, %v581, %v583
        %590 = vst [vmem:[#allocation2 + $0xa8] sm:$0xf0] %v584
        %591 = vst [vmem:[#allocation2 + $0xb0] sm:$0xf0] %v585
        %592 = vst [vmem:[#allocation2 + $0xb8] sm:$0xf0] %v586
        %v593 = vld [vmem:[%s423] sm:$0xff]
        %v594 = vld [vmem:[%s423 + $0x8] sm:$0xff]
        %v597 = vcombine.high %v593, %v593
        %v598 = vcombine.high %v594, %v594
        %599 = vrot.lane.b32.xlu0 %v593, 78
        %v600 = vpop.permute.xlu0 %599
        %601 = vrot.lane.b32.xlu0 %v597, 78
        %v602 = vpop.permute.xlu0 %601
        %603 = vrot.lane.b32.xlu0 %v594, 78
        %v604 = vpop.permute.xlu0 %603
        %605 = vrot.lane.b32.xlu0 %v598, 78
        %v606 = vpop.permute.xlu0 %605
        %v607 = vsel %vm413, %v600, %v602
        %v608 = vsel %vm413, %v602, %v604
        %v609 = vsel %vm413, %v604, %v606
        %613 = vst [vmem:[#allocation2 + $0xd8] sm:$0xf] %v607
        %614 = vst [vmem:[#allocation2 + $0xe0] sm:$0xf] %v608
        %615 = vst [vmem:[#allocation2 + $0xe8] sm:$0xf] %v609
        %v616 = vld [vmem:[%s218] sm:$0xf]
        %v617 = vld [vmem:[%s222] sm:$0xf]
        %v618 = vld [vmem:[#allocation2] sm:$0xff]
        %v619 = vld [vmem:[#allocation2 + $0x8] sm:$0xff]
        %v620 = vld [vmem:[#allocation2 + $0x10] sm:$0xff]
        %v621 = vld [vmem:[#allocation2 + $0x18] sm:$0xff]
        %v622 = vld [vmem:[#allocation2 + $0x20] sm:$0xff]
        %v623 = vld [vmem:[#allocation2 + $0x28] sm:$0xff]
        %v624 = vld [vmem:[#allocation2 + $0x30] sm:$0xff]
        %v625 = vld [vmem:[#allocation2 + $0x38] sm:$0xff]
        %v626 = vld [vmem:[#allocation2 + $0x40] sm:$0xff]
        %v627 = vld [vmem:[#allocation2 + $0x48] sm:$0xff]
        %v628 = vld [vmem:[#allocation2 + $0x50] sm:$0xff]
        %v629 = vld [vmem:[#allocation2 + $0x58] sm:$0xff]
        %v630 = vld [vmem:[#allocation2 + $0x60] sm:$0xff]
        %v631 = vld [vmem:[#allocation2 + $0x68] sm:$0xff]
        %v632 = vld [vmem:[#allocation2 + $0x70] sm:$0xff]
        %v633 = vld [vmem:[#allocation2 + $0x78] sm:$0xff]
        %v634 = vld [vmem:[#allocation2 + $0x80] sm:$0xff]
        %v635 = vld [vmem:[#allocation2 + $0x88] sm:$0xff]
        %v636 = vld [vmem:[#allocation2 + $0x90] sm:$0xff]
        %v637 = vld [vmem:[#allocation2 + $0x98] sm:$0xff]
        %v638 = vld [vmem:[#allocation2 + $0xa0] sm:$0xff]
        %v639 = vld [vmem:[#allocation2 + $0xa8] sm:$0xff]
        %v640 = vld [vmem:[#allocation2 + $0xb0] sm:$0xff]
        %v641 = vld [vmem:[#allocation2 + $0xb8] sm:$0xff]
        %v642 = vld [vmem:[#allocation2 + $0xc0] sm:$0xf]
        %v643 = vld [vmem:[#allocation2 + $0xc8] sm:$0xf]
        %v644 = vld [vmem:[#allocation2 + $0xd0] sm:$0xf]
        %v645 = vld [vmem:[#allocation2 + $0xd8] sm:$0xf]
        %v646 = vld [vmem:[#allocation2 + $0xe0] sm:$0xf]
        %v647 = vld [vmem:[#allocation2 + $0xe8] sm:$0xf]
        %649 = vset.pattern.permute.xlu0 0
        %650 = vperm.xlu0 %649, %v617
        %v651 = vpop.permute.xlu0 %650
        %vm653 = vcmask 293888
        %v655 = vsel %vm653, %v616, 0
        %vm657 = vcmask 1043456
        %v659 = vsel %vm657, %v642, 0
        %v662 = vsel %vm657, %v643, 0
        %v665 = vsel %vm657, %v644, 0
        %v668 = vsel %vm657, %v645, 0
        %v671 = vsel %vm657, %v646, 0
        %v674 = vsel %vm657, %v647, 0
        %676 = vmatprep.subr.mxu0 %v619
        %677 = vmatpush1.msra.mxu0 %v618
        %678 = vmatprep.subr.mxu0 %v625
        %679 = vmatpush1.msra.mxu0 %v624
        %680 = vmatprep.subr.mxu0 %v631
        %681 = vmatpush1.msra.mxu0 %v630
        %682 = vmatprep.subr.mxu0 %v637
        %683 = vmatpush1.msra.mxu0 %v636
        %684 = vmatprep.subr.mxu0 %v662
        %685 = vmatpush1.msra.mxu0 %v659
        %686 = vmatprep.subr.mxu0 0.0
        %687 = vmatpush1.msra.mxu0 0.0
        %688 = vmatprep.subr.mxu0 0.0
        %689 = vmatpush1.msra.mxu0 0.0
        %690 = vmatprep.subr.mxu0 0.0
        %691 = vmatpush1.msra.mxu0 0.0
        %692 = vmatprep.subr.mxu0 0.0
        %693 = vmatpush1.msra.mxu0 0.0
        %694 = vmatprep.subr.mxu0 0.0
        %695 = vmatpush1.msra.mxu0 0.0
        %696 = vmatprep.subr.mxu0 0.0
        %697 = vmatpush1.msra.mxu0 0.0
        %698 = vmatprep.subr.mxu0 0.0
        %699 = vmatpush1.msra.mxu0 0.0
        %700 = vmatprep.subr.mxu0 0.0
        %701 = vmatpush1.msra.mxu0 0.0
        %702 = vmatprep.subr.mxu0 0.0
        %703 = vmatpush1.msra.mxu0 0.0
        %704 = vmatprep.subr.mxu0 0.0
        %705 = vmatpush1.msra.mxu0 0.0
        %706 = vmatprep.subr.mxu0 0.0
        %707 = vmatpush1.msra.mxu0 0.0
        %708 = vmatprep.subr.mxu0 0.0
        %709 = vmatpush1.msra.mxu0 0.0
        %710 = vmatprep.subr.mxu0 0.0
        %711 = vmatpush1.msra.mxu0 0.0
        %712 = vmatprep.subr.mxu0 0.0
        %713 = vmatpush1.msra.mxu0 0.0
        %714 = vmatprep.subr.mxu0 0.0
        %715 = vmatpush1.msra.mxu0 0.0
        %716 = vmatprep.subr.mxu0 0.0
        %717 = vmatpush1.msra.mxu0 0.0
        %718 = vmatprep.subr.mxu0 0.0
        %719 = vmatpush1.msra.mxu0 0.0
        %720 = vmatprep.subr.mxu0 0.0
        %721 = vmatpush1.msra.mxu0 0.0
        %722 = vmatprep.subr.mxu0 0.0
        %723 = vmatpush1.msra.mxu0 0.0
        %724 = vmatprep.subr.mxu0 0.0
        %725 = vmatpush1.msra.mxu0 0.0
        %726 = vmatprep.subr.mxu0 0.0
        %727 = vmatpush1.msra.mxu0 0.0
        %728 = vmatprep.subr.mxu0 0.0
        %729 = vmatpush1.msra.mxu0 0.0
        %730 = vmatprep.subr.mxu0 0.0
        %731 = vmatpush1.msra.mxu0 0.0
        %732 = vmatprep.subr.mxu0 0.0
        %733 = vmatpush1.msra.mxu0 0.0
        %734 = vmatprep.subr.mxu0 0.0
        %735 = vmatpush1.msra.mxu0 0.0
        %736 = vmatprep.subr.mxu0 0.0
        %737 = vmatpush1.msra.mxu0 0.0
        %738 = vmatprep.subr.mxu0 0.0
        %739 = vmatpush1.msra.mxu0 0.0
        %740 = vmatprep.mubr.f32.mxu0 0.0
        %741 = vmatmul.mubr.f32.gmra.mrb[0].mxu0 %v655
        %v742 = vpop.f32.mrb[0].mxu0
        %v743 = vadd.f32 %v651, %v742
        %v744 = vpop.f32.mrb[0].mxu0
        %v745 = vadd.f32 %v651, %v744
        %746 = vdwg.mxu0
        %747 = vmatprep.subr.mxu0 %v621
        %748 = vmatpush1.msra.mxu0 %v620
        %749 = vmatprep.subr.mxu0 %v627
        %750 = vmatpush1.msra.mxu0 %v626
        %751 = vmatprep.subr.mxu0 %v633
        %752 = vmatpush1.msra.mxu0 %v632
        %753 = vmatprep.subr.mxu0 %v639
        %754 = vmatpush1.msra.mxu0 %v638
        %755 = vmatprep.subr.mxu0 %v668
        %756 = vmatpush1.msra.mxu0 %v665
        %757 = vmatprep.subr.mxu0 0.0
        %758 = vmatpush1.msra.mxu0 0.0
        %759 = vmatprep.subr.mxu0 0.0
        %760 = vmatpush1.msra.mxu0 0.0
        %761 = vmatprep.subr.mxu0 0.0
        %762 = vmatpush1.msra.mxu0 0.0
        %763 = vmatprep.subr.mxu0 0.0
        %764 = vmatpush1.msra.mxu0 0.0
        %765 = vmatprep.subr.mxu0 0.0
        %766 = vmatpush1.msra.mxu0 0.0
        %767 = vmatprep.subr.mxu0 0.0
        %768 = vmatpush1.msra.mxu0 0.0
        %769 = vmatprep.subr.mxu0 0.0
        %770 = vmatpush1.msra.mxu0 0.0
        %771 = vmatprep.subr.mxu0 0.0
        %772 = vmatpush1.msra.mxu0 0.0
        %773 = vmatprep.subr.mxu0 0.0
        %774 = vmatpush1.msra.mxu0 0.0
        %775 = vmatprep.subr.mxu0 0.0
        %776 = vmatpush1.msra.mxu0 0.0
        %777 = vmatprep.subr.mxu0 0.0
        %778 = vmatpush1.msra.mxu0 0.0
        %779 = vmatprep.subr.mxu0 0.0
        %780 = vmatpush1.msra.mxu0 0.0
        %781 = vmatprep.subr.mxu0 0.0
        %782 = vmatpush1.msra.mxu0 0.0
        %783 = vmatprep.subr.mxu0 0.0
        %784 = vmatpush1.msra.mxu0 0.0
        %785 = vmatprep.subr.mxu0 0.0
        %786 = vmatpush1.msra.mxu0 0.0
        %787 = vmatprep.subr.mxu0 0.0
        %788 = vmatpush1.msra.mxu0 0.0
        %789 = vmatprep.subr.mxu0 0.0
        %790 = vmatpush1.msra.mxu0 0.0
        %791 = vmatprep.subr.mxu0 0.0
        %792 = vmatpush1.msra.mxu0 0.0
        %793 = vmatprep.subr.mxu0 0.0
        %794 = vmatpush1.msra.mxu0 0.0
        %795 = vmatprep.subr.mxu0 0.0
        %796 = vmatpush1.msra.mxu0 0.0
        %797 = vmatprep.subr.mxu0 0.0
        %798 = vmatpush1.msra.mxu0 0.0
        %799 = vmatprep.subr.mxu0 0.0
        %800 = vmatpush1.msra.mxu0 0.0
        %801 = vmatprep.subr.mxu0 0.0
        %802 = vmatpush1.msra.mxu0 0.0
        %803 = vmatprep.subr.mxu0 0.0
        %804 = vmatpush1.msra.mxu0 0.0
        %805 = vmatprep.subr.mxu0 0.0
        %806 = vmatpush1.msra.mxu0 0.0
        %807 = vmatprep.subr.mxu0 0.0
        %808 = vmatpush1.msra.mxu0 0.0
        %809 = vmatprep.subr.mxu0 0.0
        %810 = vmatpush1.msra.mxu0 0.0
        %811 = vmatprep.mubr.f32.mxu0 0.0
        %812 = vmatmul.mubr.f32.gmra.mrb[0].mxu0 %v655
        %v813 = vpop.f32.mrb[0].mxu0
        %v814 = vadd.f32 %v651, %v813
        %v815 = vpop.f32.mrb[0].mxu0
        %v816 = vadd.f32 %v651, %v815
        %817 = vdwg.mxu0
        %818 = vmatprep.subr.mxu0 %v623
        %819 = vmatpush1.msra.mxu0 %v622
        %820 = vmatprep.subr.mxu0 %v629
        %821 = vmatpush1.msra.mxu0 %v628
        %822 = vmatprep.subr.mxu0 %v635
        %823 = vmatpush1.msra.mxu0 %v634
        %824 = vmatprep.subr.mxu0 %v641
        %825 = vmatpush1.msra.mxu0 %v640
        %826 = vmatprep.subr.mxu0 %v674
        %827 = vmatpush1.msra.mxu0 %v671
        %828 = vmatprep.subr.mxu0 0.0
        %829 = vmatpush1.msra.mxu0 0.0
        %830 = vmatprep.subr.mxu0 0.0
        %831 = vmatpush1.msra.mxu0 0.0
        %832 = vmatprep.subr.mxu0 0.0
        %833 = vmatpush1.msra.mxu0 0.0
        %834 = vmatprep.subr.mxu0 0.0
        %835 = vmatpush1.msra.mxu0 0.0
        %836 = vmatprep.subr.mxu0 0.0
        %837 = vmatpush1.msra.mxu0 0.0
        %838 = vmatprep.subr.mxu0 0.0
        %839 = vmatpush1.msra.mxu0 0.0
        %840 = vmatprep.subr.mxu0 0.0
        %841 = vmatpush1.msra.mxu0 0.0
        %842 = vmatprep.subr.mxu0 0.0
        %843 = vmatpush1.msra.mxu0 0.0
        %844 = vmatprep.subr.mxu0 0.0
        %845 = vmatpush1.msra.mxu0 0.0
        %846 = vmatprep.subr.mxu0 0.0
        %847 = vmatpush1.msra.mxu0 0.0
        %848 = vmatprep.subr.mxu0 0.0
        %849 = vmatpush1.msra.mxu0 0.0
        %850 = vmatprep.subr.mxu0 0.0
        %851 = vmatpush1.msra.mxu0 0.0
        %852 = vmatprep.subr.mxu0 0.0
        %853 = vmatpush1.msra.mxu0 0.0
        %854 = vmatprep.subr.mxu0 0.0
        %855 = vmatpush1.msra.mxu0 0.0
        %856 = vmatprep.subr.mxu0 0.0
        %857 = vmatpush1.msra.mxu0 0.0
        %858 = vmatprep.subr.mxu0 0.0
        %859 = vmatpush1.msra.mxu0 0.0
        %860 = vmatprep.subr.mxu0 0.0
        %861 = vmatpush1.msra.mxu0 0.0
        %862 = vmatprep.subr.mxu0 0.0
        %863 = vmatpush1.msra.mxu0 0.0
        %864 = vmatprep.subr.mxu0 0.0
        %865 = vmatpush1.msra.mxu0 0.0
        %866 = vmatprep.subr.mxu0 0.0
        %867 = vmatpush1.msra.mxu0 0.0
        %868 = vmatprep.subr.mxu0 0.0
        %869 = vmatpush1.msra.mxu0 0.0
        %870 = vmatprep.subr.mxu0 0.0
        %871 = vmatpush1.msra.mxu0 0.0
        %872 = vmatprep.subr.mxu0 0.0
        %873 = vmatpush1.msra.mxu0 0.0
        %874 = vmatprep.subr.mxu0 0.0
        %875 = vmatpush1.msra.mxu0 0.0
        %876 = vmatprep.subr.mxu0 0.0
        %877 = vmatpush1.msra.mxu0 0.0
        %878 = vmatprep.subr.mxu0 0.0
        %879 = vmatpush1.msra.mxu0 0.0
        %880 = vmatprep.subr.mxu0 0.0
        %881 = vmatpush1.msra.mxu0 0.0
        %882 = vmatprep.mubr.f32.mxu0 0.0
        %883 = vmatmul.mubr.f32.gmra.mrb[0].mxu0 %v655
        %v884 = vpop.f32.mrb[0].mxu0
        %v885 = vadd.f32 %v651, %v884
        %v886 = vpop.f32.mrb[0].mxu0
        %v887 = vadd.f32 %v651, %v886
        %888 = vdwg.mxu0
        %v895 = vcombine.low %v743, %v745
        %v896 = vcombine.low %v814, %v816
        %v897 = vcombine.low %v885, %v887
        %901 = vst [vmem:[%s214] sm:$0xff] %v895
        %902 = vst [vmem:[%s214 + $0x8] sm:$0xff] %v896
        %903 = vst [vmem:[%s214 + $0x10] sm:$0xff] %v897
        %s904 = sand.u32 %s106, 1
        %s905 = scalar_lea.sflag [#allocation5], %s904
        %s906 = sand.u32 %s106, 1
        %s907 = smul.addr %s906, 24
        %s908 = scalar_lea.vmem [#allocation6], %s907
        // Predicated region
        $region37: #{tpu_custom_call.1} parent=31 // pred_check
          %p909 = pneg %p116
        $region38: #{tpu_custom_call.1} parent=31 // pred_check_branch
          %911 = sbr.rel (%p909) target = $region40
        $region39: #{tpu_custom_call.1} parent=31 // pred_region
          %s913 = ssub.s32 384, 384
          %914 = vsyncadd %s905, %s913
          %s915 = smul.addr %s20, 6
          %s916 = smul.addr %s915, 64
          %s917 = scalar_lea.hbm %s3, %s916
          %s919 = sshll.u32 %s908, 4
          %s920 = int_to_ptr.vmem [resolvable:$true] %s919
          %922 = dma.vmem_to_hbm [thread:$0]  %s920, 384, %s917, %s905
        $region40: #{tpu_custom_call.1} parent=31 // pred_fallthru
          _
      $region32: #{tpu_custom_call.1} parent=5 // pred_fallthru
        _
      %p923 = scmp.le.s32.totalorder 2, %s15
      // Predicated region
      $region41: #{tpu_custom_call.1} parent=5 // pred_check
        %p924 = pneg %p923
      $region42: #{tpu_custom_call.1} parent=5 // pred_check_branch
        %926 = sbr.rel (%p924) target = $region44
      $region43: #{tpu_custom_call.1} parent=5 // pred_region
        %s927 = ssub.s32 %s15, 2
        // Predicated region
        $region45: #{tpu_custom_call.1} parent=43 // pred_check
          %p928 = pneg %p122
        $region46: #{tpu_custom_call.1} parent=43 // pred_check_branch
          %930 = sbr.rel (%p928) target = $region48
        $region47: #{tpu_custom_call.1} parent=43 // pred_region
          %s931 = sand.u32 %s107, 1
          %s932 = scalar_lea.sflag [#allocation5], %s931
          %s933 = sand.u32 %s107, 1
          %s934 = smul.addr %s933, 24
          %s935 = scalar_lea.vmem [#allocation6], %s934
          %936 = dma.done %s932, 384
        $region48: #{tpu_custom_call.1} parent=43 // pred_fallthru
          _
      $region44: #{tpu_custom_call.1} parent=5 // pred_fallthru
        _
    $region6: #{tpu_custom_call.1} parent=1 // loop_footer
      %s19 = sadd.s32 1, %s15
    $region7: #{tpu_custom_call.1} parent=1 // loop_footer_branch
      %14 = sbr.rel target = $region3
    $region8: #{tpu_custom_call.1} parent=1 // loop_exit
      _
    %937 = vsyncpa [#allocation4], 1
    %s938 = scalar_lea.sflag [#allocation4], 1
    %939 = vsyncpa %s938, 1
    %940 = vsyncpa [#allocation5], 1
    %s941 = scalar_lea.sflag [#allocation5], 1
    %942 = vsyncpa %s941, 1

</llo_original>
